<compile_context>
chip_gen: v5e
topology: v5e:2x2
jax: 0.10.0
libtpu: 0.0.40
codegen_flags: <defaults>
</compile_context>

<pallas_src>
import numpy as np
import jax
import jax.numpy as jnp
from jax import lax
from jax.experimental import pallas as pl
from jax.experimental.pallas import tpu as pltpu


def _leaky(x):
    # F.leaky_relu(x, negative_slope=0.1)
    return jnp.where(x > 0, x, 0.1 * x)


# ----------------------------------------------------------------------------
# Fused Pallas kernel (whole graph resident in VMEM; grid = ())
# ----------------------------------------------------------------------------
def inter_gat_kernel(sd_col_ref, dst_col_ref, dst_row_ref,        # [2E,1],[E,1],[1,E] int32
                     h_ref, w_ref,                                # [N,in_dim], [E,e_in]
                     wen_ref, wee_ref, wsfa_ref,                  # [in,D], [e_in,e_in], [1,e_in]
                     wif_ref, bif_ref, wattn_ref,                 # [2D+e_in,D], [1,D], [1,D]
                     wch_ref, bch_ref,                            # [2D+e_in,D], [1,D]
                     wagg_ref, bagg_ref,                          # BN-folded: [2D+2e_in,eo], [1,eo]
                     hnew_ref, wout_ref, sat_ref):                # outputs
    f32 = jnp.float32
    N, D = hnew_ref.shape
    E, e_in = w_ref.shape

    # ---- one-hot gather / segment-sum matrices from edge endpoint indices ----
    iota_2en = lax.broadcasted_iota(jnp.int32, (2 * E, N), 1)       # node id along lanes
    sd_gather = (sd_col_ref[...] == iota_2en).astype(f32)           # [2E,N]: rows 0:E=src, E:2E=dst
    iota_en = lax.broadcasted_iota(jnp.int32, (E, N), 1)
    dst_bool = dst_col_ref[...] == iota_en                          # [E,N] bool (softmax mask)
    iota_ne = lax.broadcasted_iota(jnp.int32, (N, E), 0)            # node id along sublanes
    dst_scatter = (dst_row_ref[...] == iota_ne).astype(f32)         # [N,E]: segment-sum over in-edges

    # ---- embed_node + gather node features onto edges (one stacked MXU pass) -
    h_emb = jnp.dot(h_ref[...], wen_ref[...], preferred_element_type=f32)   # [N,D]
    hsd = jnp.dot(sd_gather, h_emb, preferred_element_type=f32)             # [2E,D]
    h_src = hsd[0:E]
    h_dst = hsd[E:2 * E]

    # ---- self_attention -------------------------------------------------------
    ow = jnp.dot(w_ref[...], wee_ref[...], preferred_element_type=f32)      # embed_edge [E,e_in]
    esa = jnp.sum(_leaky(ow) * wsfa_ref[...], axis=-1, keepdims=True)       # edge_sf_atten [E,1] (VPU)
    w1 = esa * ow

    # ---- inter_attention: build sat once, reuse it for inter_fuse ------------
    sat = jnp.concatenate([h_src, h_dst, w1], axis=-1)                      # [E,2D+e_in]
    sat_ref[...] = sat
    z2 = jnp.dot(sat, wif_ref[...], preferred_element_type=f32) + bif_ref[...]   # [E,D]
    inw = _leaky(z2)
    att = jnp.sum(inw * wattn_ref[...], axis=-1, keepdims=True)             # attn_fc [E,1] (VPU)
    w2 = att * w1                                                           # [E,e_in]

    # ---- reduce_func2: per-dst softmax aggregation ----------------------------
    # Per-node max (not global): cancels exactly in the per-node ratio, and
    # avoids exp underflow for nodes whose edges sit far below the global max.
    neg_inf = f32(-jnp.inf)
    node_max = jnp.max(jnp.where(dst_bool, att, neg_inf), axis=0, keepdims=True)   # [1,N]
    m_edge = jnp.max(jnp.where(dst_bool, node_max, neg_inf), axis=1, keepdims=True)  # [E,1]
    p = jnp.exp(att - m_edge)                                               # [E,1], in (0,1]

    # Single fused scatter matmul: [p*h_src | p*w2 | p]
    agg_in = jnp.concatenate([p * h_src, p * w2, p], axis=-1)               # [E, D+e_in+1]
    agg = jnp.dot(dst_scatter, agg_in, preferred_element_type=f32)          # [N, D+e_in+1]
    s = agg[:, D + e_in:D + e_in + 1]                                       # per-node denom [N,1]
    inv_s = jnp.where(s > 0.0, pl.reciprocal(s, approx=True), 0.0)          # zero in-degree guard

    # concentrate_h(cat([agg_h, agg_w, oh])): one K=(2D+e_in) dot
    ch_in = jnp.concatenate([agg[:, 0:D] * inv_s,
                             agg[:, D:D + e_in] * inv_s,
                             h_emb], axis=-1)                               # [N, 2D+e_in]
    h_new = jnp.dot(ch_in, wch_ref[...], preferred_element_type=f32) + bch_ref[...]   # [N,D]
    hnew_ref[...] = h_new

    # ---- edge_calc: BN folded into wagg/bagg; one K=(2D+2e_in) dot ------------
    hn_sd = jnp.dot(sd_gather, h_new, preferred_element_type=f32)           # [2E,D]
    eo_in = jnp.concatenate([hn_sd[0:E], hn_sd[E:2 * E], w2, ow], axis=-1)  # [E, 2D+2e_in]
    wout_ref[...] = jnp.dot(eo_in, wagg_ref[...], preferred_element_type=f32) + bagg_ref[...]


# ----------------------------------------------------------------------------
# Wrapper: one pallas_call, everything in VMEM (tiny shapes)
# ----------------------------------------------------------------------------
def inter_gat_forward(params, h, edge_w, src, dst):
    N = h.shape[0]
    E, e_in = edge_w.shape
    D = params["W_en_T"].shape[1]
    e_out = params["W_agg_T"].shape[1]

    src = src.astype(jnp.int32)
    dst = dst.astype(jnp.int32)
    sd_col = jnp.concatenate([src, dst]).reshape(2 * E, 1)
    dst_col = dst.reshape(E, 1)
    dst_row = dst.reshape(1, E)

    # Fold eval-mode BatchNorm1d (static affine) into aggre_embed_edge weights.
    scale = params["bn_gamma"] * lax.rsqrt(params["bn_var"] + 1e-5)     # [1, e_in]
    shift = params["bn_beta"] - params["bn_mean"] * scale               # [1, e_in]
    W_agg = params["W_agg_T"]                                           # [2D+2e_in, e_out]
    W_agg_folded = jnp.concatenate(
        [W_agg[:2 * D],
         W_agg[2 * D:2 * D + e_in] * scale.reshape(e_in, 1),
         W_agg[2 * D + e_in:]], axis=0)
    b_agg_folded = jnp.dot(shift, W_agg[2 * D:2 * D + e_in])            # [1, e_out]

    vmem = lambda: pl.BlockSpec(memory_space=pltpu.MemorySpace.VMEM)
    out_shape = (jax.ShapeDtypeStruct((N, D), jnp.float32),
                 jax.ShapeDtypeStruct((E, e_out), jnp.float32),
                 jax.ShapeDtypeStruct((E, 2 * D + e_in), jnp.float32))

    h_new, w_out, sat = pl.pallas_call(
        inter_gat_kernel,
        out_shape=out_shape,
        in_specs=[vmem() for _ in range(15)],
        out_specs=(vmem(), vmem(), vmem()),
        compiler_params=pltpu.CompilerParams(vmem_limit_bytes=32 * 1024 * 1024),
    )(sd_col, dst_col, dst_row,
      h, edge_w,
      params["W_en_T"], params["W_ee_T"], params["W_sfa"],
      params["W_if_T"], params["b_if"], params["W_attn"],
      params["W_ch_T"], params["b_ch"],
      W_agg_folded, b_agg_folded)
    return h_new, w_out, sat


# ----------------------------------------------------------------------------
# Pure-JAX reference (faithful translation, for self-check)
# ----------------------------------------------------------------------------
def reference_forward(params, h, edge_w, src, dst):
    dot = lambda a, b: jnp.dot(a, b, precision=lax.Precision.HIGHEST)
    h_emb = dot(h, params["W_en_T"])
    hs, hd = h_emb[src], h_emb[dst]
    ow = dot(edge_w, params["W_ee_T"])
    esa = dot(_leaky(ow), params["W_sfa"].T)
    w1 = esa * ow
    sat = jnp.concatenate([hs, hd, w1], -1)
    z2 = dot(sat, params["W_if_T"]) + params["b_if"]
    inw = _leaky(z2)
    att = dot(inw, params["W_attn"].T)
    w2 = att * w1
    N = h.shape[0]
    mask = (dst[None, :] == jnp.arange(N)[:, None])
    logits = jnp.where(mask, att.reshape(1, -1), -jnp.inf)
    m = jnp.max(logits, -1, keepdims=True)
    p = jnp.where(mask, jnp.exp(logits - m), 0.0)
    alpha = p / jnp.sum(p, -1, keepdims=True)
    h_agg = dot(alpha, jnp.concatenate([hs, w2], -1))
    h_new = dot(jnp.concatenate([h_agg, h_emb], -1), params["W_ch_T"]) + params["b_ch"]
    w_bn = (w2 - params["bn_mean"]) * params["bn_gamma"] / jnp.sqrt(params["bn_var"] + 1e-5) \
           + params["bn_beta"]
    z = jnp.concatenate([h_new[src], h_new[dst], w_bn, ow], -1)
    w_out = dot(z, params["W_agg_T"])
    return h_new, w_out, sat


# ----------------------------------------------------------------------------
# Deterministic parameter init (shapes from interGATLayer.__init__)
# ----------------------------------------------------------------------------
def init_params(key, in_dim, out_dim, e_in, e_out):
    gain = float(np.sqrt(2.0))  # nn.init.calculate_gain('relu')
    ks = jax.random.split(key, 12)

    def xn(k, out_f, in_f):  # xavier_normal_ on a PyTorch [out, in] weight
        std = gain * np.sqrt(2.0 / (in_f + out_f))
        return std * jax.random.normal(k, (out_f, in_f), jnp.float32)

    W_en = xn(ks[0], out_dim, in_dim)                 # embed_node
    W_attn = xn(ks[1], 1, out_dim)                    # attn_fc (kept as row vector)
    W_if = xn(ks[2], out_dim, 2 * out_dim + e_in)     # inter_fuse
    b_if = 0.05 * jax.random.normal(ks[3], (1, out_dim), jnp.float32)
    W_ee = xn(ks[4], e_in, e_in)                      # embed_edge
    W_sfa = xn(ks[5], 1, e_in)                        # edge_sf_atten (row vector)
    W_ch = xn(ks[6], out_dim, 2 * out_dim + e_in)     # concentrate_h
    b_ch = 0.05 * jax.random.normal(ks[7], (1, out_dim), jnp.float32)
    W_agg = xn(ks[8], e_out, 2 * out_dim + 2 * e_in)  # aggre_embed_edge

    return dict(
        W_en_T=W_en.T, W_attn=W_attn, W_if_T=W_if.T, b_if=b_if,
        W_ee_T=W_ee.T, W_sfa=W_sfa, W_ch_T=W_ch.T, b_ch=b_ch,
        W_agg_T=W_agg.T,
        # BatchNorm1d(e_in) eval-mode stats (fresh module: gamma=1, beta=0)
        bn_gamma=jnp.ones((1, e_in), jnp.float32),
        bn_beta=jnp.zeros((1, e_in), jnp.float32),
        bn_mean=jnp.zeros((1, e_in), jnp.float32),
        bn_var=jnp.ones((1, e_in), jnp.float32),
    )


# ----------------------------------------------------------------------------
if __name__ == "__main__":
    in_dim, out_dim, e_in, e_out = 16, 32, 16, 32
    # bond_feature / en_embedding only used in enviro_cal (use_env=False) -> unused.
    N = 8

    # Graph: ring edges (every node gets in-degree >= 1) + a few extra edges.
    ring_src = np.arange(N)
    ring_dst = (np.arange(N) + 1) % N
    extra_src = np.array([0, 2, 5, 7, 3, 6, 1, 4])
    extra_dst = np.array([3, 6, 1, 4, 0, 2, 5, 7])
    src = jnp.asarray(np.concatenate([ring_src, extra_src]), dtype=jnp.int32)
    dst = jnp.asarray(np.concatenate([ring_dst, extra_dst]), dtype=jnp.int32)
    E = int(src.shape[0])  # 16

    key = jax.random.PRNGKey(0)
    k_h, k_w, k_p = jax.random.split(key, 3)
    h = jax.random.normal(k_h, (N, in_dim), jnp.float32)        # node features
    edge_w = jax.random.normal(k_w, (E, e_in), jnp.float32)     # g.edata['w']
    params = init_params(k_p, in_dim, out_dim, e_in, e_out)

    forward = jax.jit(inter_gat_forward)
    h_out, w_out, sat_out = forward(params, h, edge_w, src, dst)
    jax.block_until_ready((h_out, w_out, sat_out))

    assert h_out.shape == (N, out_dim)
    assert w_out.shape == (E, e_out)
    assert sat_out.shape == (E, 2 * out_dim + e_in)

    h_ref, w_ref, sat_ref = reference_forward(params, h, edge_w, src, dst)
    np.testing.assert_allclose(np.asarray(h_out), np.asarray(h_ref), rtol=2e-2, atol=2e-2)
    np.testing.assert_allclose(np.asarray(w_out), np.asarray(w_ref), rtol=2e-2, atol=2e-2)
    np.testing.assert_allclose(np.asarray(sat_out), np.asarray(sat_ref), rtol=2e-2, atol=2e-2)

    print("KERNEL_OK")
</pallas_src>

<mosaic_0001>
module attributes {stable_mosaic.version = 11 : i64} {
  func.func @inter_gat_kernel(%arg0: memref<32x1xi32, #tpu.memory_space<vmem>>, %arg1: memref<16x1xi32, #tpu.memory_space<vmem>>, %arg2: memref<1x16xi32, #tpu.memory_space<vmem>>, %arg3: memref<8x16xf32, #tpu.memory_space<vmem>>, %arg4: memref<16x16xf32, #tpu.memory_space<vmem>>, %arg5: memref<16x32xf32, #tpu.memory_space<vmem>>, %arg6: memref<16x16xf32, #tpu.memory_space<vmem>>, %arg7: memref<1x16xf32, #tpu.memory_space<vmem>>, %arg8: memref<80x32xf32, #tpu.memory_space<vmem>>, %arg9: memref<1x32xf32, #tpu.memory_space<vmem>>, %arg10: memref<1x32xf32, #tpu.memory_space<vmem>>, %arg11: memref<80x32xf32, #tpu.memory_space<vmem>>, %arg12: memref<1x32xf32, #tpu.memory_space<vmem>>, %arg13: memref<96x32xf32, #tpu.memory_space<vmem>>, %arg14: memref<1x32xf32, #tpu.memory_space<vmem>>, %arg15: memref<8x32xf32, #tpu.memory_space<vmem>>, %arg16: memref<16x32xf32, #tpu.memory_space<vmem>>, %arg17: memref<16x80xf32, #tpu.memory_space<vmem>>) attributes {dimension_semantics = [], scalar_prefetch = 0 : i64, scratch_operands = 0 : i64, tpu.core_type = #tpu.core_type<tc>} {
    %0 = tpu.iota {dimensions = array<i32: 1>} : vector<32x8xi32>
    %c0 = arith.constant 0 : index
    %c0_0 = arith.constant 0 : index
    %1 = vector.load %arg0[%c0, %c0_0] : memref<32x1xi32, #tpu.memory_space<vmem>>, vector<32x1xi32>
    %2 = vector.broadcast %1 : vector<32x1xi32> to vector<32x8xi32>
    %3 = arith.cmpi eq, %2, %0 : vector<32x8xi32>
    %4 = arith.extui %3 : vector<32x8xi1> to vector<32x8xi32>
    %5 = arith.sitofp %4 : vector<32x8xi32> to vector<32x8xf32>
    %6 = tpu.iota {dimensions = array<i32: 1>} : vector<16x8xi32>
    %c0_1 = arith.constant 0 : index
    %c0_2 = arith.constant 0 : index
    %7 = vector.load %arg1[%c0_1, %c0_2] : memref<16x1xi32, #tpu.memory_space<vmem>>, vector<16x1xi32>
    %8 = vector.broadcast %7 : vector<16x1xi32> to vector<16x8xi32>
    %9 = arith.cmpi eq, %8, %6 : vector<16x8xi32>
    %10 = tpu.iota {dimensions = array<i32: 0>} : vector<8x16xi32>
    %c0_3 = arith.constant 0 : index
    %c0_4 = arith.constant 0 : index
    %11 = vector.load %arg2[%c0_3, %c0_4] : memref<1x16xi32, #tpu.memory_space<vmem>>, vector<1x16xi32>
    %12 = vector.broadcast %11 : vector<1x16xi32> to vector<8x16xi32>
    %13 = arith.cmpi eq, %12, %10 : vector<8x16xi32>
    %14 = arith.extui %13 : vector<8x16xi1> to vector<8x16xi32>
    %15 = arith.sitofp %14 : vector<8x16xi32> to vector<8x16xf32>
    %c0_5 = arith.constant 0 : index
    %c0_6 = arith.constant 0 : index
    %16 = vector.load %arg3[%c0_5, %c0_6] : memref<8x16xf32, #tpu.memory_space<vmem>>, vector<8x16xf32>
    %c0_7 = arith.constant 0 : index
    %c0_8 = arith.constant 0 : index
    %17 = vector.load %arg5[%c0_7, %c0_8] : memref<16x32xf32, #tpu.memory_space<vmem>>, vector<16x32xf32>
    %cst = arith.constant dense<0.000000e+00> : vector<8x32xf32>
    %18 = tpu.matmul %16, %17, %cst {dimension_numbers = #tpu.dot_dimension_numbers<[1], [0], [0], [1], [0, 0, 1, 1], [], []>} : vector<8x16xf32>, vector<16x32xf32>, vector<8x32xf32> -> vector<8x32xf32>
    %cst_9 = arith.constant dense<0.000000e+00> : vector<32x32xf32>
    %19 = tpu.matmul %5, %18, %cst_9 {dimension_numbers = #tpu.dot_dimension_numbers<[1], [0], [0], [1], [0, 0, 1, 1], [], []>} : vector<32x8xf32>, vector<8x32xf32>, vector<32x32xf32> -> vector<32x32xf32>
    %20 = vector.extract_strided_slice %19 {offsets = [0, 0], sizes = [16, 32], strides = [1, 1]} : vector<32x32xf32> to vector<16x32xf32>
    %21 = vector.extract_strided_slice %19 {offsets = [16, 0], sizes = [16, 32], strides = [1, 1]} : vector<32x32xf32> to vector<16x32xf32>
    %c0_10 = arith.constant 0 : index
    %c0_11 = arith.constant 0 : index
    %22 = vector.load %arg4[%c0_10, %c0_11] : memref<16x16xf32, #tpu.memory_space<vmem>>, vector<16x16xf32>
    %c0_12 = arith.constant 0 : index
    %c0_13 = arith.constant 0 : index
    %23 = vector.load %arg6[%c0_12, %c0_13] : memref<16x16xf32, #tpu.memory_space<vmem>>, vector<16x16xf32>
    %cst_14 = arith.constant dense<0.000000e+00> : vector<16x16xf32>
    %24 = tpu.matmul %22, %23, %cst_14 {dimension_numbers = #tpu.dot_dimension_numbers<[1], [0], [0], [1], [0, 0, 1, 1], [], []>} : vector<16x16xf32>, vector<16x16xf32>, vector<16x16xf32> -> vector<16x16xf32>
    %cst_15 = arith.constant 0.000000e+00 : f32
    %25 = vector.broadcast %cst_15 : f32 to vector<16x16xf32>
    %26 = arith.cmpf ogt, %24, %25 : vector<16x16xf32>
    %cst_16 = arith.constant 1.000000e-01 : f32
    %27 = vector.broadcast %cst_16 : f32 to vector<16x16xf32>
    %28 = arith.mulf %27, %24 : vector<16x16xf32>
    %29 = arith.select %26, %24, %28 : vector<16x16xi1>, vector<16x16xf32>
    %c0_17 = arith.constant 0 : index
    %c0_18 = arith.constant 0 : index
    %30 = vector.load %arg7[%c0_17, %c0_18] : memref<1x16xf32, #tpu.memory_space<vmem>>, vector<1x16xf32>
    %31 = vector.broadcast %30 : vector<1x16xf32> to vector<16x16xf32>
    %32 = arith.mulf %29, %31 : vector<16x16xf32>
    %cst_19 = arith.constant dense<0.000000e+00> : vector<16xf32>
    %33 = vector.multi_reduction <add>, %32, %cst_19 [1] : vector<16x16xf32> to vector<16xf32>
    %34 = vector.shape_cast %33 : vector<16xf32> to vector<16x1xf32>
    %35 = vector.broadcast %34 : vector<16x1xf32> to vector<16x16xf32>
    %36 = arith.mulf %35, %24 : vector<16x16xf32>
    %37 = tpu.concatenate %20, %21, %36 in 1 : vector<16x32xf32>, vector<16x32xf32>, vector<16x16xf32> -> vector<16x80xf32>
    %c0_20 = arith.constant 0 : index
    %c0_21 = arith.constant 0 : index
    %38 = vector.load %arg17[%c0_20, %c0_21] : memref<16x80xf32, #tpu.memory_space<vmem>>, vector<16x80xf32>
    tpu.vector_store %arg17[%c0_20, %c0_21], %37 {strides = array<i32>} : memref<16x80xf32, #tpu.memory_space<vmem>>, vector<16x80xf32>,
    %c0_22 = arith.constant 0 : index
    %c0_23 = arith.constant 0 : index
    %39 = vector.load %arg8[%c0_22, %c0_23] : memref<80x32xf32, #tpu.memory_space<vmem>>, vector<80x32xf32>
    %cst_24 = arith.constant dense<0.000000e+00> : vector<16x32xf32>
    %40 = tpu.matmul %37, %39, %cst_24 {dimension_numbers = #tpu.dot_dimension_numbers<[1], [0], [0], [1], [0, 0, 1, 1], [], []>} : vector<16x80xf32>, vector<80x32xf32>, vector<16x32xf32> -> vector<16x32xf32>
    %c0_25 = arith.constant 0 : index
    %c0_26 = arith.constant 0 : index
    %41 = vector.load %arg9[%c0_25, %c0_26] : memref<1x32xf32, #tpu.memory_space<vmem>>, vector<1x32xf32>
    %42 = vector.broadcast %41 : vector<1x32xf32> to vector<16x32xf32>
    %43 = arith.addf %40, %42 : vector<16x32xf32>
    %cst_27 = arith.constant 0.000000e+00 : f32
    %44 = vector.broadcast %cst_27 : f32 to vector<16x32xf32>
    %45 = arith.cmpf ogt, %43, %44 : vector<16x32xf32>
    %cst_28 = arith.constant 1.000000e-01 : f32
    %46 = vector.broadcast %cst_28 : f32 to vector<16x32xf32>
    %47 = arith.mulf %46, %43 : vector<16x32xf32>
    %48 = arith.select %45, %43, %47 : vector<16x32xi1>, vector<16x32xf32>
    %c0_29 = arith.constant 0 : index
    %c0_30 = arith.constant 0 : index
    %49 = vector.load %arg10[%c0_29, %c0_30] : memref<1x32xf32, #tpu.memory_space<vmem>>, vector<1x32xf32>
    %50 = vector.broadcast %49 : vector<1x32xf32> to vector<16x32xf32>
    %51 = arith.mulf %48, %50 : vector<16x32xf32>
    %cst_31 = arith.constant dense<0.000000e+00> : vector<16xf32>
    %52 = vector.multi_reduction <add>, %51, %cst_31 [1] : vector<16x32xf32> to vector<16xf32>
    %53 = vector.shape_cast %52 : vector<16xf32> to vector<16x1xf32>
    %54 = vector.broadcast %53 : vector<16x1xf32> to vector<16x16xf32>
    %55 = arith.mulf %54, %36 : vector<16x16xf32>
    %cst_32 = arith.constant 0xFF800000 : f32
    %56 = vector.shape_cast %53 : vector<16x1xf32> to vector<16x1xf32>
    %57 = vector.broadcast %56 : vector<16x1xf32> to vector<16x8xf32>
    %58 = vector.broadcast %cst_32 : f32 to vector<16x8xf32>
    %59 = arith.select %9, %57, %58 : vector<16x8xi1>, vector<16x8xf32>
    %cst_33 = arith.constant dense<0xFF800000> : vector<8xf32>
    %60 = vector.multi_reduction <maximumf>, %59, %cst_33 [0] : vector<16x8xf32> to vector<8xf32>
    %61 = vector.shape_cast %60 : vector<8xf32> to vector<1x8xf32>
    %cst_34 = arith.constant 0xFF800000 : f32
    %62 = vector.shape_cast %61 : vector<1x8xf32> to vector<1x8xf32>
    %63 = vector.broadcast %62 : vector<1x8xf32> to vector<16x8xf32>
    %64 = vector.broadcast %cst_34 : f32 to vector<16x8xf32>
    %65 = arith.select %9, %63, %64 : vector<16x8xi1>, vector<16x8xf32>
    %cst_35 = arith.constant dense<0xFF800000> : vector<16xf32>
    %66 = vector.multi_reduction <maximumf>, %65, %cst_35 [1] : vector<16x8xf32> to vector<16xf32>
    %67 = vector.shape_cast %66 : vector<16xf32> to vector<16x1xf32>
    %68 = arith.subf %53, %67 : vector<16x1xf32>
    %69 = math.exp %68 : vector<16x1xf32>
    %70 = vector.broadcast %69 : vector<16x1xf32> to vector<16x32xf32>
    %71 = arith.mulf %70, %20 : vector<16x32xf32>
    %72 = vector.broadcast %69 : vector<16x1xf32> to vector<16x16xf32>
    %73 = arith.mulf %72, %55 : vector<16x16xf32>
    %74 = tpu.concatenate %71, %73, %69 in 1 : vector<16x32xf32>, vector<16x16xf32>, vector<16x1xf32> -> vector<16x49xf32>
    %cst_36 = arith.constant dense<0.000000e+00> : vector<8x49xf32>
    %75 = tpu.matmul %15, %74, %cst_36 {dimension_numbers = #tpu.dot_dimension_numbers<[1], [0], [0], [1], [0, 0, 1, 1], [], []>} : vector<8x16xf32>, vector<16x49xf32>, vector<8x49xf32> -> vector<8x49xf32>
    %76 = vector.extract_strided_slice %75 {offsets = [0, 48], sizes = [8, 1], strides = [1, 1]} : vector<8x49xf32> to vector<8x1xf32>
    %cst_37 = arith.constant 0.000000e+00 : f32
    %77 = vector.broadcast %cst_37 : f32 to vector<8x1xf32>
    %78 = arith.cmpf ogt, %76, %77 : vector<8x1xf32>
    %79 = tpu.reciprocal %76 {approx = true} : vector<8x1xf32> -> vector<8x1xf32>
    %cst_38 = arith.constant 0.000000e+00 : f32
    %80 = vector.broadcast %cst_38 : f32 to vector<8x1xf32>
    %81 = arith.select %78, %79, %80 : vector<8x1xi1>, vector<8x1xf32>
    %82 = vector.extract_strided_slice %75 {offsets = [0, 0], sizes = [8, 32], strides = [1, 1]} : vector<8x49xf32> to vector<8x32xf32>
    %83 = vector.broadcast %81 : vector<8x1xf32> to vector<8x32xf32>
    %84 = arith.mulf %82, %83 : vector<8x32xf32>
    %85 = vector.extract_strided_slice %75 {offsets = [0, 32], sizes = [8, 16], strides = [1, 1]} : vector<8x49xf32> to vector<8x16xf32>
    %86 = vector.broadcast %81 : vector<8x1xf32> to vector<8x16xf32>
    %87 = arith.mulf %85, %86 : vector<8x16xf32>
    %88 = tpu.concatenate %84, %87, %18 in 1 : vector<8x32xf32>, vector<8x16xf32>, vector<8x32xf32> -> vector<8x80xf32>
    %c0_39 = arith.constant 0 : index
    %c0_40 = arith.constant 0 : index
    %89 = vector.load %arg11[%c0_39, %c0_40] : memref<80x32xf32, #tpu.memory_space<vmem>>, vector<80x32xf32>
    %cst_41 = arith.constant dense<0.000000e+00> : vector<8x32xf32>
    %90 = tpu.matmul %88, %89, %cst_41 {dimension_numbers = #tpu.dot_dimension_numbers<[1], [0], [0], [1], [0, 0, 1, 1], [], []>} : vector<8x80xf32>, vector<80x32xf32>, vector<8x32xf32> -> vector<8x32xf32>
    %c0_42 = arith.constant 0 : index
    %c0_43 = arith.constant 0 : index
    %91 = vector.load %arg12[%c0_42, %c0_43] : memref<1x32xf32, #tpu.memory_space<vmem>>, vector<1x32xf32>
    %92 = vector.broadcast %91 : vector<1x32xf32> to vector<8x32xf32>
    %93 = arith.addf %90, %92 : vector<8x32xf32>
    %c0_44 = arith.constant 0 : index
    %c0_45 = arith.constant 0 : index
    %94 = vector.load %arg15[%c0_44, %c0_45] : memref<8x32xf32, #tpu.memory_space<vmem>>, vector<8x32xf32>
    tpu.vector_store %arg15[%c0_44, %c0_45], %93 {strides = array<i32>} : memref<8x32xf32, #tpu.memory_space<vmem>>, vector<8x32xf32>,
    %cst_46 = arith.constant dense<0.000000e+00> : vector<32x32xf32>
    %95 = tpu.matmul %5, %93, %cst_46 {dimension_numbers = #tpu.dot_dimension_numbers<[1], [0], [0], [1], [0, 0, 1, 1], [], []>} : vector<32x8xf32>, vector<8x32xf32>, vector<32x32xf32> -> vector<32x32xf32>
    %96 = vector.extract_strided_slice %95 {offsets = [0, 0], sizes = [16, 32], strides = [1, 1]} : vector<32x32xf32> to vector<16x32xf32>
    %97 = vector.extract_strided_slice %95 {offsets = [16, 0], sizes = [16, 32], strides = [1, 1]} : vector<32x32xf32> to vector<16x32xf32>
    %98 = tpu.concatenate %96, %97, %55, %24 in 1 : vector<16x32xf32>, vector<16x32xf32>, vector<16x16xf32>, vector<16x16xf32> -> vector<16x96xf32>
    %c0_47 = arith.constant 0 : index
    %c0_48 = arith.constant 0 : index
    %99 = vector.load %arg13[%c0_47, %c0_48] : memref<96x32xf32, #tpu.memory_space<vmem>>, vector<96x32xf32>
    %cst_49 = arith.constant dense<0.000000e+00> : vector<16x32xf32>
    %100 = tpu.matmul %98, %99, %cst_49 {dimension_numbers = #tpu.dot_dimension_numbers<[1], [0], [0], [1], [0, 0, 1, 1], [], []>} : vector<16x96xf32>, vector<96x32xf32>, vector<16x32xf32> -> vector<16x32xf32>
    %c0_50 = arith.constant 0 : index
    %c0_51 = arith.constant 0 : index
    %101 = vector.load %arg14[%c0_50, %c0_51] : memref<1x32xf32, #tpu.memory_space<vmem>>, vector<1x32xf32>
    %102 = vector.broadcast %101 : vector<1x32xf32> to vector<16x32xf32>
    %103 = arith.addf %100, %102 : vector<16x32xf32>
    %c0_52 = arith.constant 0 : index
    %c0_53 = arith.constant 0 : index
    %104 = vector.load %arg16[%c0_52, %c0_53] : memref<16x32xf32, #tpu.memory_space<vmem>>, vector<16x32xf32>
    tpu.vector_store %arg16[%c0_52, %c0_53], %103 {strides = array<i32>} : memref<16x32xf32, #tpu.memory_space<vmem>>, vector<16x32xf32>,
    return
  }
}

</mosaic_0001>

<llo_original>
// kernel: inter_gat_forward.1
$region0: #{inter_gat_forward.1}
  #allocation0 [shape = 'u32[]', space=smem, size = 0x4, offset = 0x4, fixed_abs, tag = 'smem constant byte address 0x4 - core index']
  #allocation1 [shape = 'u32[72,128]{1,0:T(1,128)}', space=vmem, size = 0x9000, scoped, tag = 'internal scratch']
  %s0 = inlined_call_operand.vmem [shape: s32[32,1], index: 0, kind: input, shape index: {}]
  %s1 = inlined_call_operand.vmem [shape: s32[16,1], index: 1, kind: input, shape index: {}]
  %s2 = inlined_call_operand.vmem [shape: s32[1,16], index: 2, kind: input, shape index: {}]
  %s3 = inlined_call_operand.vmem [shape: f32[8,16], index: 3, kind: input, shape index: {}]
  %s4 = inlined_call_operand.vmem [shape: f32[16,16], index: 4, kind: input, shape index: {}]
  %s5 = inlined_call_operand.vmem [shape: f32[16,32], index: 5, kind: input, shape index: {}]
  %s6 = inlined_call_operand.vmem [shape: f32[16,16], index: 6, kind: input, shape index: {}]
  %s7 = inlined_call_operand.vmem [shape: f32[1,16], index: 7, kind: input, shape index: {}]
  %s8 = inlined_call_operand.vmem [shape: f32[80,32], index: 8, kind: input, shape index: {}]
  %s9 = inlined_call_operand.vmem [shape: f32[1,32], index: 9, kind: input, shape index: {}]
  %s10 = inlined_call_operand.vmem [shape: f32[1,32], index: 10, kind: input, shape index: {}]
  %s11 = inlined_call_operand.vmem [shape: f32[80,32], index: 11, kind: input, shape index: {}]
  %s12 = inlined_call_operand.vmem [shape: f32[1,32], index: 12, kind: input, shape index: {}]
  %s13 = inlined_call_operand.vmem [shape: f32[96,32], index: 13, kind: input, shape index: {}]
  %s14 = inlined_call_operand.vmem [shape: f32[1,32], index: 14, kind: input, shape index: {}]
  %s15 = inlined_call_operand.hbm [shape: f32[8,32], index: 15, kind: output, shape index: {0}]
  %s16 = inlined_call_operand.hbm [shape: f32[16,32], index: 16, kind: output, shape index: {1}]
  %s17 = inlined_call_operand.hbm [shape: f32[16,80], index: 17, kind: output, shape index: {2}]
  %18 = xla_tuple %s15, %s16, %s17
  %s19 = sld [smem:[#allocation0]]
  $region86: #{inter_gat_forward.1} parent=0
    _
  %s21 = ssub.s32 1, %s19
  %s22 = scalar_select 0, %s21, %s19
  $region1: #{inter_gat_forward.1} parent=0
    #allocation2 [shape = 'u8[4096]{0}', space=vmem, size = 0x1000, scoped, tag = 'output window, operand 0, single buffered']
    #allocation3 [shape = 's32[1]{0}', space=sflag, size = 0x4, scoped, tag = 'scoped memory for inter_gat_forward.1']
    #allocation4 [shape = 'u8[8192]{0}', space=vmem, size = 0x2000, scoped, tag = 'output window, operand 1, single buffered']
    #allocation5 [shape = 's32[1]{0}', space=sflag, size = 0x4, scoped, tag = 'scoped memory for inter_gat_forward.1']
    #allocation6 [shape = 'u8[8192]{0}', space=vmem, size = 0x2000, scoped, tag = 'output window, operand 2, single buffered']
    %23 = vsyncpa [#allocation3], 0
    %24 = vsyncpa [#allocation5], 0
    // Predicated region
    $region2: #{inter_gat_forward.1} parent=1 // pred_check
      _
    $region3: #{inter_gat_forward.1} parent=1 // pred_check_branch
      %26 = sbr.rel (0) target = $region5
    $region4: #{inter_gat_forward.1} parent=1 // pred_region
      _
    $region5: #{inter_gat_forward.1} parent=1 // pred_fallthru
      _
    // Predicated region
    $region6: #{inter_gat_forward.1} parent=1 // pred_check
      _
    $region7: #{inter_gat_forward.1} parent=1 // pred_check_branch
      %28 = sbr.rel (0) target = $region9
    $region8: #{inter_gat_forward.1} parent=1 // pred_region
      _
    $region9: #{inter_gat_forward.1} parent=1 // pred_fallthru
      _
    // Predicated region
    $region10: #{inter_gat_forward.1} parent=1 // pred_check
      _
    $region11: #{inter_gat_forward.1} parent=1 // pred_check_branch
      %30 = sbr.rel (0) target = $region13
    $region12: #{inter_gat_forward.1} parent=1 // pred_region
      _
    $region13: #{inter_gat_forward.1} parent=1 // pred_fallthru
      _
    // Predicated region
    $region14: #{inter_gat_forward.1} parent=1 // pred_check
      _
    $region15: #{inter_gat_forward.1} parent=1 // pred_check_branch
      %32 = sbr.rel (0) target = $region17
    $region16: #{inter_gat_forward.1} parent=1 // pred_region
      _
    $region17: #{inter_gat_forward.1} parent=1 // pred_fallthru
      _
    // Predicated region
    $region18: #{inter_gat_forward.1} parent=1 // pred_check
      _
    $region19: #{inter_gat_forward.1} parent=1 // pred_check_branch
      %34 = sbr.rel (0) target = $region21
    $region20: #{inter_gat_forward.1} parent=1 // pred_region
      _
    $region21: #{inter_gat_forward.1} parent=1 // pred_fallthru
      _
    // Predicated region
    $region22: #{inter_gat_forward.1} parent=1 // pred_check
      _
    $region23: #{inter_gat_forward.1} parent=1 // pred_check_branch
      %36 = sbr.rel (0) target = $region25
    $region24: #{inter_gat_forward.1} parent=1 // pred_region
      _
    $region25: #{inter_gat_forward.1} parent=1 // pred_fallthru
      _
    // Predicated region
    $region26: #{inter_gat_forward.1} parent=1 // pred_check
      _
    $region27: #{inter_gat_forward.1} parent=1 // pred_check_branch
      %38 = sbr.rel (0) target = $region29
    $region28: #{inter_gat_forward.1} parent=1 // pred_region
      _
    $region29: #{inter_gat_forward.1} parent=1 // pred_fallthru
      _
    // Predicated region
    $region30: #{inter_gat_forward.1} parent=1 // pred_check
      _
    $region31: #{inter_gat_forward.1} parent=1 // pred_check_branch
      %40 = sbr.rel (0) target = $region33
    $region32: #{inter_gat_forward.1} parent=1 // pred_region
      _
    $region33: #{inter_gat_forward.1} parent=1 // pred_fallthru
      _
    // Predicated region
    $region34: #{inter_gat_forward.1} parent=1 // pred_check
      _
    $region35: #{inter_gat_forward.1} parent=1 // pred_check_branch
      %42 = sbr.rel (0) target = $region37
    $region36: #{inter_gat_forward.1} parent=1 // pred_region
      _
    $region37: #{inter_gat_forward.1} parent=1 // pred_fallthru
      _
    // Predicated region
    $region38: #{inter_gat_forward.1} parent=1 // pred_check
      _
    $region39: #{inter_gat_forward.1} parent=1 // pred_check_branch
      %44 = sbr.rel (0) target = $region41
    $region40: #{inter_gat_forward.1} parent=1 // pred_region
      _
    $region41: #{inter_gat_forward.1} parent=1 // pred_fallthru
      _
    // Predicated region
    $region42: #{inter_gat_forward.1} parent=1 // pred_check
      _
    $region43: #{inter_gat_forward.1} parent=1 // pred_check_branch
      %46 = sbr.rel (0) target = $region45
    $region44: #{inter_gat_forward.1} parent=1 // pred_region
      _
    $region45: #{inter_gat_forward.1} parent=1 // pred_fallthru
      _
    // Predicated region
    $region46: #{inter_gat_forward.1} parent=1 // pred_check
      _
    $region47: #{inter_gat_forward.1} parent=1 // pred_check_branch
      %48 = sbr.rel (0) target = $region49
    $region48: #{inter_gat_forward.1} parent=1 // pred_region
      _
    $region49: #{inter_gat_forward.1} parent=1 // pred_fallthru
      _
    // Predicated region
    $region50: #{inter_gat_forward.1} parent=1 // pred_check
      _
    $region51: #{inter_gat_forward.1} parent=1 // pred_check_branch
      %50 = sbr.rel (0) target = $region53
    $region52: #{inter_gat_forward.1} parent=1 // pred_region
      _
    $region53: #{inter_gat_forward.1} parent=1 // pred_fallthru
      _
    // Predicated region
    $region54: #{inter_gat_forward.1} parent=1 // pred_check
      _
    $region55: #{inter_gat_forward.1} parent=1 // pred_check_branch
      %52 = sbr.rel (0) target = $region57
    $region56: #{inter_gat_forward.1} parent=1 // pred_region
      _
    $region57: #{inter_gat_forward.1} parent=1 // pred_fallthru
      _
    // Predicated region
    $region58: #{inter_gat_forward.1} parent=1 // pred_check
      _
    $region59: #{inter_gat_forward.1} parent=1 // pred_check_branch
      %54 = sbr.rel (0) target = $region61
    $region60: #{inter_gat_forward.1} parent=1 // pred_region
      _
    $region61: #{inter_gat_forward.1} parent=1 // pred_fallthru
      _
    %v55 = vlaneseq
    %v56 = vand.u32 %v55, 127
    %v57 = vld [vmem:[%s0] sm:$0xff]
    %v58 = vld [vmem:[%s0 + $0x8] sm:$0xff]
    %v59 = vld [vmem:[%s0 + $0x10] sm:$0xff]
    %v60 = vld [vmem:[%s0 + $0x18] sm:$0xff]
    %61 = vset.pattern.permute.xlu0 0
    %62 = vperm.xlu0 %61, %v57
    %v63 = vpop.permute.xlu0 %62
    %64 = vset.pattern.permute.xlu0 0
    %65 = vperm.xlu0 %64, %v58
    %v66 = vpop.permute.xlu0 %65
    %67 = vset.pattern.permute.xlu0 0
    %68 = vperm.xlu0 %67, %v59
    %v69 = vpop.permute.xlu0 %68
    %70 = vset.pattern.permute.xlu0 0
    %71 = vperm.xlu0 %70, %v60
    %v72 = vpop.permute.xlu0 %71
    %vm73 = vcmp.eq.s32.totalorder %v63, %v56
    %vm74 = vcmp.eq.s32.totalorder %v66, %v56
    %vm75 = vcmp.eq.s32.totalorder %v69, %v56
    %vm76 = vcmp.eq.s32.totalorder %v72, %v56
    %v77 = vsel %vm73, 1, 0
    %v78 = vsel %vm74, 1, 0
    %v79 = vsel %vm75, 1, 0
    %v80 = vsel %vm76, 1, 0
    %v81 = vcvt.s32.f32 %v77
    %v82 = vcvt.s32.f32 %v78
    %v83 = vcvt.s32.f32 %v79
    %v84 = vcvt.s32.f32 %v80
    %v85 = vld [vmem:[%s1] sm:$0xff]
    %v86 = vld [vmem:[%s1 + $0x8] sm:$0xff]
    %87 = vset.pattern.permute.xlu0 0
    %88 = vperm.xlu0 %87, %v85
    %v89 = vpop.permute.xlu0 %88
    %90 = vset.pattern.permute.xlu0 0
    %91 = vperm.xlu0 %90, %v86
    %v92 = vpop.permute.xlu0 %91
    %vm93 = vcmp.eq.s32.totalorder %v89, %v56
    %vm94 = vcmp.eq.s32.totalorder %v92, %v56
    %v95 = vlaneseq
    %v96 = vshrl.u32 %v95, 7
    %v97 = vld [vmem:[%s2] sm:$0x1]
    %v98 = vperm.slane %v97, 0
    %vm99 = vcmp.eq.s32.totalorder %v98, %v96
    %v100 = vsel %vm99, 1, 0
    %v101 = vcvt.s32.f32 %v100
    %v102 = vld [vmem:[%s3] sm:$0xff]
    %v103 = vld [vmem:[%s5] sm:$0xff]
    %v104 = vld [vmem:[%s5 + $0x8] sm:$0xff]
    %vm105 = vcmask 130048
    %v107 = vsel %vm105, %v102, 0
    %109 = vmatpush.msra.mxu0 0.0
    %110 = vmatpush.msra.mxu0 0.0
    %111 = vmatpush.msra.mxu0 0.0
    %112 = vmatpush.msra.mxu0 0.0
    %113 = vmatpush.msra.mxu0 0.0
    %114 = vmatpush.msra.mxu0 0.0
    %115 = vmatpush.msra.mxu0 0.0
    %116 = vmatpush.msra.mxu0 0.0
    %117 = vmatpush.msra.mxu0 0.0
    %118 = vmatpush.msra.mxu0 0.0
    %119 = vmatpush.msra.mxu0 0.0
    %120 = vmatpush.msra.mxu0 0.0
    %121 = vmatpush.msra.mxu0 0.0
    %122 = vmatpush.msra.mxu0 0.0
    %123 = vmatpush.msra.mxu0 %v104
    %124 = vmatpush.msra.mxu0 %v103
    %125 = vmatmul.f32.gmra.mxu0 %v107
    %v126 = vpop.f32.mrf.mxu0
    %v127 = vadd.f32 0.0, %v126
    %128 = vdwg.mxu0
    %vm129 = vcmask 64512
    %v131 = vsel %vm129, %v81, 0
    %v134 = vsel %vm129, %v82, 0
    %v137 = vsel %vm129, %v83, 0
    %v140 = vsel %vm129, %v84, 0
    %142 = vmatpush.msra.mxu0 0.0
    %143 = vmatpush.msra.mxu0 0.0
    %144 = vmatpush.msra.mxu0 0.0
    %145 = vmatpush.msra.mxu0 0.0
    %146 = vmatpush.msra.mxu0 0.0
    %147 = vmatpush.msra.mxu0 0.0
    %148 = vmatpush.msra.mxu0 0.0
    %149 = vmatpush.msra.mxu0 0.0
    %150 = vmatpush.msra.mxu0 0.0
    %151 = vmatpush.msra.mxu0 0.0
    %152 = vmatpush.msra.mxu0 0.0
    %153 = vmatpush.msra.mxu0 0.0
    %154 = vmatpush.msra.mxu0 0.0
    %155 = vmatpush.msra.mxu0 0.0
    %156 = vmatpush.msra.mxu0 0.0
    %157 = vmatpush.msra.mxu0 %v127
    %158 = vmatmul.f32.gmra.mxu0 %v131
    %v159 = vpop.f32.mrf.mxu0
    %v160 = vadd.f32 0.0, %v159
    %161 = vmatmul.f32.gmra.mxu0 %v134
    %v162 = vpop.f32.mrf.mxu0
    %v163 = vadd.f32 0.0, %v162
    %164 = vmatmul.f32.gmra.mxu0 %v137
    %v165 = vpop.f32.mrf.mxu0
    %v166 = vadd.f32 0.0, %v165
    %167 = vmatmul.f32.gmra.mxu0 %v140
    %v168 = vpop.f32.mrf.mxu0
    %v169 = vadd.f32 0.0, %v168
    %170 = vdwg.mxu0
    %v171 = vld [vmem:[%s4] sm:$0xff]
    %v172 = vld [vmem:[%s4 + $0x8] sm:$0xff]
    %v173 = vld [vmem:[%s6] sm:$0xff]
    %v174 = vld [vmem:[%s6 + $0x8] sm:$0xff]
    %v176 = vsel %vm105, %v171, 0
    %v179 = vsel %vm105, %v172, 0
    %181 = vmatpush.msra.mxu0 0.0
    %182 = vmatpush.msra.mxu0 0.0
    %183 = vmatpush.msra.mxu0 0.0
    %184 = vmatpush.msra.mxu0 0.0
    %185 = vmatpush.msra.mxu0 0.0
    %186 = vmatpush.msra.mxu0 0.0
    %187 = vmatpush.msra.mxu0 0.0
    %188 = vmatpush.msra.mxu0 0.0
    %189 = vmatpush.msra.mxu0 0.0
    %190 = vmatpush.msra.mxu0 0.0
    %191 = vmatpush.msra.mxu0 0.0
    %192 = vmatpush.msra.mxu0 0.0
    %193 = vmatpush.msra.mxu0 0.0
    %194 = vmatpush.msra.mxu0 0.0
    %195 = vmatpush.msra.mxu0 %v174
    %196 = vmatpush.msra.mxu0 %v173
    %197 = vmatmul.f32.gmra.mxu0 %v176
    %v198 = vpop.f32.mrf.mxu0
    %v199 = vadd.f32 0.0, %v198
    %200 = vmatmul.f32.gmra.mxu0 %v179
    %v201 = vpop.f32.mrf.mxu0
    %v202 = vadd.f32 0.0, %v201
    %203 = vdwg.mxu0
    %vm204 = vcmp.gt.f32.partialorder %v199, 0.0
    %vm205 = vcmp.gt.f32.partialorder %v202, 0.0
    %v206 = vmul.f32 %v199, 0.1
    %v207 = vmul.f32 %v202, 0.1
    %v208 = vsel %vm204, %v199, %v206
    %v209 = vsel %vm205, %v202, %v207
    %v210 = vld [vmem:[%s7] sm:$0x1]
    %v212 = vperm.slane %v210, 0
    %v214 = vmul.f32 %v208, %v212
    %v215 = vmul.f32 %v209, %v212
    %v216 = vsel %vm105, %v214, 0.0
    %217 = vadd.xlane.f32.xlu0 %v216
    %v218 = vpop.xlane.xlu0 %217
    %v219 = vsel %vm105, %v215, 0.0
    %220 = vadd.xlane.f32.xlu0 %v219
    %v221 = vpop.xlane.xlu0 %220
    %v222 = vmul.f32 %v218, %v199
    %v223 = vmul.f32 %v221, %v202
    %226 = vrot.lane.b32.xlu0 %v166, 32
    %v227 = vpop.permute.xlu0 %226
    %228 = vrot.lane.b32.xlu0 %v169, 32
    %v229 = vpop.permute.xlu0 %228
    %234 = vrot.lane.b32.xlu0 %v222, 64
    %v235 = vpop.permute.xlu0 %234
    %236 = vrot.lane.b32.xlu0 %v223, 64
    %v237 = vpop.permute.xlu0 %236
    %vm240 = vcmask 261120
    %v241 = vsel %vm240, %v160, %v227
    %v242 = vsel %vm240, %v163, %v229
    %vm243 = vcmask 523264
    %v244 = vsel %vm243, %v241, %v235
    %v245 = vsel %vm243, %v242, %v237
    %vm246 = vcmask 654336
    %247 = vst.msk [vmem:[#allocation6] sm:$0xff] %vm246, %v244
    %248 = vst.msk [vmem:[#allocation6 + $0x8] sm:$0xff] %vm246, %v245
    %v249 = vld [vmem:[%s8] sm:$0xff]
    %v250 = vld [vmem:[%s8 + $0x8] sm:$0xff]
    %v251 = vld [vmem:[%s8 + $0x10] sm:$0xff]
    %v252 = vld [vmem:[%s8 + $0x18] sm:$0xff]
    %v253 = vld [vmem:[%s8 + $0x20] sm:$0xff]
    %v254 = vld [vmem:[%s8 + $0x28] sm:$0xff]
    %v255 = vld [vmem:[%s8 + $0x30] sm:$0xff]
    %v256 = vld [vmem:[%s8 + $0x38] sm:$0xff]
    %v257 = vld [vmem:[%s8 + $0x40] sm:$0xff]
    %v258 = vld [vmem:[%s8 + $0x48] sm:$0xff]
    %v259 = vld [vmem:[%s9] sm:$0x1]
    %v261 = vperm.slane %v259, 0
    %v264 = vsel %vm246, %v244, 0
    %v267 = vsel %vm246, %v245, 0
    %269 = vmatpush.msra.mxu0 0.0
    %270 = vmatpush.msra.mxu0 0.0
    %271 = vmatpush.msra.mxu0 0.0
    %272 = vmatpush.msra.mxu0 0.0
    %273 = vmatpush.msra.mxu0 0.0
    %274 = vmatpush.msra.mxu0 0.0
    %275 = vmatpush.msra.mxu0 %v258
    %276 = vmatpush.msra.mxu0 %v257
    %277 = vmatpush.msra.mxu0 %v256
    %278 = vmatpush.msra.mxu0 %v255
    %279 = vmatpush.msra.mxu0 %v254
    %280 = vmatpush.msra.mxu0 %v253
    %281 = vmatpush.msra.mxu0 %v252
    %282 = vmatpush.msra.mxu0 %v251
    %283 = vmatpush.msra.mxu0 %v250
    %284 = vmatpush.msra.mxu0 %v249
    %285 = vmatmul.f32.gmra.mxu0 %v264
    %v286 = vpop.f32.mrf.mxu0
    %v287 = vadd.f32 %v261, %v286
    %288 = vmatmul.f32.gmra.mxu0 %v267
    %v289 = vpop.f32.mrf.mxu0
    %v290 = vadd.f32 %v261, %v289
    %291 = vdwg.mxu0
    %vm292 = vcmp.gt.f32.partialorder %v287, 0.0
    %vm293 = vcmp.gt.f32.partialorder %v290, 0.0
    %v294 = vmul.f32 %v287, 0.1
    %v295 = vmul.f32 %v290, 0.1
    %v296 = vsel %vm292, %v287, %v294
    %v297 = vsel %vm293, %v290, %v295
    %v298 = vld [vmem:[%s10] sm:$0x1]
    %v300 = vperm.slane %v298, 0
    %v302 = vmul.f32 %v296, %v300
    %v303 = vmul.f32 %v297, %v300
    %v304 = vsel %vm240, %v302, 0.0
    %305 = vadd.xlane.f32.xlu0 %v304
    %v306 = vpop.xlane.xlu0 %305
    %v307 = vsel %vm240, %v303, 0.0
    %308 = vadd.xlane.f32.xlu0 %v307
    %v309 = vpop.xlane.xlu0 %308
    %v310 = vmul.f32 %v306, %v222
    %v311 = vmul.f32 %v309, %v223
    %v312 = vsel %vm93, %v306, -inf
    %v313 = vsel %vm94, %v309, -inf
    %v314 = vsel %vm129, %v312, -inf
    %v315 = vsel %vm129, %v313, -inf
    %v316 = vmax.f32 %v314, %v315
    %v317 = vrot.slane %v316, 4
    %v318 = vmax.f32 %v316, %v317
    %v319 = vrot.slane %v318, 2
    %v320 = vmax.f32 %v318, %v319
    %v321 = vrot.slane %v320, 1
    %v322 = vmax.f32 %v320, %v321
    %v323 = vsel %vm93, %v322, -inf
    %v324 = vsel %vm94, %v322, -inf
    %v325 = vsel %vm129, %v323, -inf
    %326 = vmax.xlane.f32.xlu0 %v325
    %v327 = vpop.xlane.xlu0 %326
    %v328 = vsel %vm129, %v324, -inf
    %329 = vmax.xlane.f32.xlu0 %v328
    %v330 = vpop.xlane.xlu0 %329
    %v331 = vsub.f32 %v306, %v327
    %v332 = vsub.f32 %v309, %v330
    %v333 = vmul.f32 %v331, 1.442695
    %v334 = vpow.pop %v333
    %v335 = vmul.f32 %v332, 1.442695
    %v336 = vpow.pop %v335
    %v337 = vmul.f32 %v334, %v160
    %v338 = vmul.f32 %v336, %v163
    %v339 = vmul.f32 %v334, %v310
    %v340 = vmul.f32 %v336, %v311
    %343 = vrot.lane.b32.xlu0 %v339, 32
    %v344 = vpop.permute.xlu0 %343
    %345 = vrot.lane.b32.xlu0 %v340, 32
    %v346 = vpop.permute.xlu0 %345
    %v349 = vsel %vm240, %v337, %v344
    %v350 = vsel %vm240, %v338, %v346
    %vm351 = vcmask 392192
    %v352 = vsel %vm351, %v349, %v334
    %v353 = vsel %vm351, %v350, %v336
    %v355 = vsel %vm105, %v101, 0
    %357 = vmatpush.msra.mxu0 0.0
    %358 = vmatpush.msra.mxu0 0.0
    %359 = vmatpush.msra.mxu0 0.0
    %360 = vmatpush.msra.mxu0 0.0
    %361 = vmatpush.msra.mxu0 0.0
    %362 = vmatpush.msra.mxu0 0.0
    %363 = vmatpush.msra.mxu0 0.0
    %364 = vmatpush.msra.mxu0 0.0
    %365 = vmatpush.msra.mxu0 0.0
    %366 = vmatpush.msra.mxu0 0.0
    %367 = vmatpush.msra.mxu0 0.0
    %368 = vmatpush.msra.mxu0 0.0
    %369 = vmatpush.msra.mxu0 0.0
    %370 = vmatpush.msra.mxu0 0.0
    %371 = vmatpush.msra.mxu0 %v353
    %372 = vmatpush.msra.mxu0 %v352
    %373 = vmatmul.f32.gmra.mxu0 %v355
    %v374 = vpop.f32.mrf.mxu0
    %v375 = vadd.f32 0.0, %v374
    %376 = vdwg.mxu0
    %vm377 = vcmp.gt.f32.partialorder %v375, 0.0
    %v378 = vrcp.pop %v375
    %v379 = vsel %vm377, %v378, 0.0
    %381 = vset.pattern.permute.xlu0 48
    %382 = vperm.xlu0 %381, %v379
    %v383 = vpop.permute.xlu0 %382
    %v385 = vmul.f32 %v375, %v383
    %387 = vrot.lane.b32.xlu0 %v127, 48
    %v388 = vpop.permute.xlu0 %387
    %v390 = vsel %vm351, %v385, %v388
    %v391 = vld [vmem:[%s11] sm:$0xff]
    %v392 = vld [vmem:[%s11 + $0x8] sm:$0xff]
    %v393 = vld [vmem:[%s11 + $0x10] sm:$0xff]
    %v394 = vld [vmem:[%s11 + $0x18] sm:$0xff]
    %v395 = vld [vmem:[%s11 + $0x20] sm:$0xff]
    %v396 = vld [vmem:[%s11 + $0x28] sm:$0xff]
    %v397 = vld [vmem:[%s11 + $0x30] sm:$0xff]
    %v398 = vld [vmem:[%s11 + $0x38] sm:$0xff]
    %v399 = vld [vmem:[%s11 + $0x40] sm:$0xff]
    %v400 = vld [vmem:[%s11 + $0x48] sm:$0xff]
    %v401 = vld [vmem:[%s12] sm:$0x1]
    %v403 = vperm.slane %v401, 0
    %v406 = vsel %vm246, %v390, 0
    %408 = vmatpush.msra.mxu0 0.0
    %409 = vmatpush.msra.mxu0 0.0
    %410 = vmatpush.msra.mxu0 0.0
    %411 = vmatpush.msra.mxu0 0.0
    %412 = vmatpush.msra.mxu0 0.0
    %413 = vmatpush.msra.mxu0 0.0
    %414 = vmatpush.msra.mxu0 %v400
    %415 = vmatpush.msra.mxu0 %v399
    %416 = vmatpush.msra.mxu0 %v398
    %417 = vmatpush.msra.mxu0 %v397
    %418 = vmatpush.msra.mxu0 %v396
    %419 = vmatpush.msra.mxu0 %v395
    %420 = vmatpush.msra.mxu0 %v394
    %421 = vmatpush.msra.mxu0 %v393
    %422 = vmatpush.msra.mxu0 %v392
    %423 = vmatpush.msra.mxu0 %v391
    %424 = vmatmul.f32.gmra.mxu0 %v406
    %v425 = vpop.f32.mrf.mxu0
    %v426 = vadd.f32 %v403, %v425
    %427 = vdwg.mxu0
    %428 = vst.msk [vmem:[#allocation2] sm:$0xff] %vm240, %v426
    %429 = vmatpush.msra.mxu0 0.0
    %430 = vmatpush.msra.mxu0 0.0
    %431 = vmatpush.msra.mxu0 0.0
    %432 = vmatpush.msra.mxu0 0.0
    %433 = vmatpush.msra.mxu0 0.0
    %434 = vmatpush.msra.mxu0 0.0
    %435 = vmatpush.msra.mxu0 0.0
    %436 = vmatpush.msra.mxu0 0.0
    %437 = vmatpush.msra.mxu0 0.0
    %438 = vmatpush.msra.mxu0 0.0
    %439 = vmatpush.msra.mxu0 0.0
    %440 = vmatpush.msra.mxu0 0.0
    %441 = vmatpush.msra.mxu0 0.0
    %442 = vmatpush.msra.mxu0 0.0
    %443 = vmatpush.msra.mxu0 0.0
    %444 = vmatpush.msra.mxu0 %v426
    %445 = vmatmul.f32.gmra.mxu0 %v131
    %v446 = vpop.f32.mrf.mxu0
    %v447 = vadd.f32 0.0, %v446
    %448 = vmatmul.f32.gmra.mxu0 %v134
    %v449 = vpop.f32.mrf.mxu0
    %v450 = vadd.f32 0.0, %v449
    %451 = vmatmul.f32.gmra.mxu0 %v137
    %v452 = vpop.f32.mrf.mxu0
    %v453 = vadd.f32 0.0, %v452
    %454 = vmatmul.f32.gmra.mxu0 %v140
    %v455 = vpop.f32.mrf.mxu0
    %v456 = vadd.f32 0.0, %v455
    %457 = vdwg.mxu0
    %460 = vrot.lane.b32.xlu0 %v453, 32
    %v461 = vpop.permute.xlu0 %460
    %462 = vrot.lane.b32.xlu0 %v456, 32
    %v463 = vpop.permute.xlu0 %462
    %468 = vrot.lane.b32.xlu0 %v310, 64
    %v469 = vpop.permute.xlu0 %468
    %470 = vrot.lane.b32.xlu0 %v311, 64
    %v471 = vpop.permute.xlu0 %470
    %476 = vrot.lane.b32.xlu0 %v199, 80
    %v477 = vpop.permute.xlu0 %476
    %478 = vrot.lane.b32.xlu0 %v202, 80
    %v479 = vpop.permute.xlu0 %478
    %v482 = vsel %vm240, %v447, %v461
    %v483 = vsel %vm240, %v450, %v463
    %v484 = vsel %vm243, %v482, %v469
    %v485 = vsel %vm243, %v483, %v471
    %v486 = vsel %vm246, %v484, %v477
    %v487 = vsel %vm246, %v485, %v479
    %v488 = vld [vmem:[%s13] sm:$0xff]
    %v489 = vld [vmem:[%s13 + $0x8] sm:$0xff]
    %v490 = vld [vmem:[%s13 + $0x10] sm:$0xff]
    %v491 = vld [vmem:[%s13 + $0x18] sm:$0xff]
    %v492 = vld [vmem:[%s13 + $0x20] sm:$0xff]
    %v493 = vld [vmem:[%s13 + $0x28] sm:$0xff]
    %v494 = vld [vmem:[%s13 + $0x30] sm:$0xff]
    %v495 = vld [vmem:[%s13 + $0x38] sm:$0xff]
    %v496 = vld [vmem:[%s13 + $0x40] sm:$0xff]
    %v497 = vld [vmem:[%s13 + $0x48] sm:$0xff]
    %v498 = vld [vmem:[%s13 + $0x50] sm:$0xff]
    %v499 = vld [vmem:[%s13 + $0x58] sm:$0xff]
    %v500 = vld [vmem:[%s14] sm:$0x1]
    %v502 = vperm.slane %v500, 0
    %vm504 = vcmask 785408
    %v506 = vsel %vm504, %v486, 0
    %v509 = vsel %vm504, %v487, 0
    %511 = vmatpush.msra.mxu0 0.0
    %512 = vmatpush.msra.mxu0 0.0
    %513 = vmatpush.msra.mxu0 0.0
    %514 = vmatpush.msra.mxu0 0.0
    %515 = vmatpush.msra.mxu0 %v499
    %516 = vmatpush.msra.mxu0 %v498
    %517 = vmatpush.msra.mxu0 %v497
    %518 = vmatpush.msra.mxu0 %v496
    %519 = vmatpush.msra.mxu0 %v495
    %520 = vmatpush.msra.mxu0 %v494
    %521 = vmatpush.msra.mxu0 %v493
    %522 = vmatpush.msra.mxu0 %v492
    %523 = vmatpush.msra.mxu0 %v491
    %524 = vmatpush.msra.mxu0 %v490
    %525 = vmatpush.msra.mxu0 %v489
    %526 = vmatpush.msra.mxu0 %v488
    %527 = vmatmul.f32.gmra.mxu0 %v506
    %v528 = vpop.f32.mrf.mxu0
    %v529 = vadd.f32 %v502, %v528
    %530 = vmatmul.f32.gmra.mxu0 %v509
    %v531 = vpop.f32.mrf.mxu0
    %v532 = vadd.f32 %v502, %v531
    %533 = vdwg.mxu0
    %534 = vst.msk [vmem:[#allocation4] sm:$0xff] %vm240, %v529
    %535 = vst.msk [vmem:[#allocation4 + $0x8] sm:$0xff] %vm240, %v532
    // Predicated region
    $region62: #{inter_gat_forward.1} parent=1 // pred_check
      _
    $region63: #{inter_gat_forward.1} parent=1 // pred_check_branch
      %537 = sbr.rel (0) target = $region65
    $region64: #{inter_gat_forward.1} parent=1 // pred_region
      %539 = vsyncadd [#allocation3], 0
      %s541 = sshll.u32 [#allocation2], 4
      %s542 = int_to_ptr.vmem [resolvable:$true] %s541
      %s543 = sshll.u32 %s15, 4
      %s544 = int_to_ptr.hbm [resolvable:$true] %s543
      %546 = dma.vmem_to_hbm [thread:$0]  %s542, 128, %s544, [#allocation3]
    $region65: #{inter_gat_forward.1} parent=1 // pred_fallthru
      _
    // Predicated region
    $region66: #{inter_gat_forward.1} parent=1 // pred_check
      _
    $region67: #{inter_gat_forward.1} parent=1 // pred_check_branch
      %548 = sbr.rel (0) target = $region69
    $region68: #{inter_gat_forward.1} parent=1 // pred_region
      %550 = vsyncadd [#allocation5], 0
      %s551 = sshll.u32 [#allocation4], 4
      %s552 = int_to_ptr.vmem [resolvable:$true] %s551
      %s553 = sshll.u32 %s16, 4
      %s554 = int_to_ptr.hbm [resolvable:$true] %s553
      %559 = dma.vmem_to_hbm [thread:$0]  %s552, 256, %s554, [#allocation5], 128, 128, 8
    $region69: #{inter_gat_forward.1} parent=1 // pred_fallthru
      _
    // Predicated region
    $region70: #{inter_gat_forward.1} parent=1 // pred_check
      _
    $region71: #{inter_gat_forward.1} parent=1 // pred_check_branch
      %561 = sbr.rel (0) target = $region73
    $region72: #{inter_gat_forward.1} parent=1 // pred_region
      %563 = vsyncadd [#allocation5], 0
      %s564 = sshll.u32 [#allocation6], 4
      %s565 = int_to_ptr.vmem [resolvable:$true] %s564
      %s566 = sshll.u32 %s17, 4
      %s567 = int_to_ptr.hbm [resolvable:$true] %s566
      %572 = dma.vmem_to_hbm [thread:$0]  %s565, 256, %s567, [#allocation5], 128, 128, 8
    $region73: #{inter_gat_forward.1} parent=1 // pred_fallthru
      _
    // Predicated region
    $region74: #{inter_gat_forward.1} parent=1 // pred_check
      _
    $region75: #{inter_gat_forward.1} parent=1 // pred_check_branch
      %574 = sbr.rel (0) target = $region77
    $region76: #{inter_gat_forward.1} parent=1 // pred_region
      %576 = dma.done [#allocation3], 128
    $region77: #{inter_gat_forward.1} parent=1 // pred_fallthru
      _
    // Predicated region
    $region78: #{inter_gat_forward.1} parent=1 // pred_check
      _
    $region79: #{inter_gat_forward.1} parent=1 // pred_check_branch
      %578 = sbr.rel (0) target = $region81
    $region80: #{inter_gat_forward.1} parent=1 // pred_region
      %580 = dma.done [#allocation5], 256
    $region81: #{inter_gat_forward.1} parent=1 // pred_fallthru
      _
    // Predicated region
    $region82: #{inter_gat_forward.1} parent=1 // pred_check
      _
    $region83: #{inter_gat_forward.1} parent=1 // pred_check_branch
      %582 = sbr.rel (0) target = $region85
    $region84: #{inter_gat_forward.1} parent=1 // pred_region
      %584 = dma.done [#allocation5], 256
    $region85: #{inter_gat_forward.1} parent=1 // pred_fallthru
      _
    %585 = vsyncpa [#allocation3], 1
    %586 = vsyncpa [#allocation5], 1

</llo_original>
